<compile_context>
chip_gen: v6e
topology: v6e:2x2x1
jax: 0.10.0
libtpu: 0.0.40
codegen_flags: <defaults>
</compile_context>

<pallas_src>
import jax
import jax.numpy as jnp
from jax.experimental import pallas as pl
from jax.experimental.pallas import tpu as pltpu


LANE_WIDTH = 512             # lane-dense last dim (multiple of 128)
MAX_TILE_ROWS = 1024         # rows per grid step -> up to 2 MiB f32 tile per input
_PALLAS_MIN_ELEMS = 1 << 16  # below this, XLA's fused reduction is strictly faster


def _mse_partial_kernel(p_ref, t_ref, out_ref):
    # One independent grid step per tile: partial sum of squared differences,
    # folded down to an (8, LANE_WIDTH) vreg-shaped slab.
    d = p_ref[...].astype(jnp.float32) - t_ref[...].astype(jnp.float32)
    sq = d * d
    tr, w = sq.shape
    # Group rows by sublane (8) and reduce the group axis: pure vreg-to-vreg
    # VPU adds, no XLU cross-lane/sublane reduce, and the (8, LANE_WIDTH)
    # store below is a fully unmasked lane-dense vst.
    out_ref[...] = jnp.sum(sq.reshape(tr // 8, 8, w), axis=0)


def mse_loss(preds, targets, *, force_pallas=False):
    assert preds.shape == targets.shape, "preds/targets must have identical shapes"
    n = preds.size
    if n == 0 or (n < _PALLAS_MIN_ELEMS and not force_pallas):
        # Tiny-input fast path: kernel launch + grid overhead is pure loss here.
        d = preds.astype(jnp.float32) - targets.astype(jnp.float32)
        return jnp.mean(d * d)

    # Adaptive tile height: large enough to amortize per-step overhead, small
    # enough that zero-padding waste stays bounded for mid-sized inputs.
    rows_needed = pl.cdiv(n, LANE_WIDTH)
    tile_rows = min(MAX_TILE_ROWS, pl.next_power_of_2(max(rows_needed, 8)))
    block_elems = tile_rows * LANE_WIDTH
    padded = pl.cdiv(n, block_elems) * block_elems

    # Flatten to a lane-dense 2-D slab; zero-pad the tail so blocks divide
    # exactly.  Identical padding on both operands contributes 0 to the sum.
    p = preds.reshape(-1)
    t = targets.reshape(-1)
    if padded != n:
        p = jnp.pad(p, (0, padded - n))
        t = jnp.pad(t, (0, padded - n))
    rows = padded // LANE_WIDTH
    p2 = p.reshape(rows, LANE_WIDTH)
    t2 = t.reshape(rows, LANE_WIDTH)
    num_tiles = rows // tile_rows

    bytes_accessed = (padded * (p2.dtype.itemsize + t2.dtype.itemsize)
                      + num_tiles * 8 * LANE_WIDTH * 4)

    partials = pl.pallas_call(
        _mse_partial_kernel,
        out_shape=jax.ShapeDtypeStruct((num_tiles * 8, LANE_WIDTH), jnp.float32),
        grid_spec=pltpu.PrefetchScalarGridSpec(
            num_scalar_prefetch=0,
            grid=(num_tiles,),
            in_specs=[
                pl.BlockSpec((tile_rows, LANE_WIDTH), lambda i: (i, 0)),
                pl.BlockSpec((tile_rows, LANE_WIDTH), lambda i: (i, 0)),
            ],
            out_specs=pl.BlockSpec((8, LANE_WIDTH), lambda i: (i, 0)),
        ),
        compiler_params=pltpu.CompilerParams(
            dimension_semantics=("parallel",),
        ),
        cost_estimate=pl.CostEstimate(
            flops=3 * padded, transcendentals=0, bytes_accessed=bytes_accessed
        ),
    )(p2, t2)

    # Tiny final reduction + divide by the TRUE element count in the wrapper.
    return jnp.sum(partials) / jnp.float32(n)


if __name__ == "__main__":
    key = jax.random.PRNGKey(0)
    k1, k2, k3, k4 = jax.random.split(key, 4)

    # Module-consistent shapes: targets = torch.randn(1, 2, 5).
    preds_s = jax.random.normal(k1, (1, 2, 5), dtype=jnp.float32)
    targets_s = jax.random.normal(k2, (1, 2, 5), dtype=jnp.float32)
    loss_s = mse_loss(preds_s, targets_s, force_pallas=True)  # exercise the kernel
    jax.block_until_ready(loss_s)
    ref_s = jnp.mean((preds_s - targets_s) ** 2)
    assert jnp.allclose(loss_s, ref_s, rtol=1e-5, atol=1e-6), (loss_s, ref_s)

    # Larger slab: multiple grid tiles on the "parallel" axis, no padding.
    preds_l = jax.random.normal(k3, (4, 512, 512), dtype=jnp.float32)
    targets_l = jax.random.normal(k4, (4, 512, 512), dtype=jnp.float32)
    loss_l = mse_loss(preds_l, targets_l)
    jax.block_until_ready(loss_l)
    ref_l = jnp.mean((preds_l - targets_l) ** 2)
    assert jnp.allclose(loss_l, ref_l, rtol=1e-4, atol=1e-5), (loss_l, ref_l)

    print("KERNEL_OK")
</pallas_src>

<mosaic_0001>
module attributes {stable_mosaic.version = 11 : i64} {
  func.func @_mse_partial_kernel(%arg0: i32, %arg1: memref<8x512xf32, #tpu.memory_space<vmem>>, %arg2: memref<8x512xf32, #tpu.memory_space<vmem>>, %arg3: memref<8x512xf32, #tpu.memory_space<vmem>>) attributes {dimension_semantics = [#tpu.dimension_semantics<parallel>], iteration_bounds = array<i64: 1>, scalar_prefetch = 0 : i64, scratch_operands = 0 : i64, tpu.core_type = #tpu.core_type<tc>, window_params = [{transform_indices = @transform_0, window_bounds = array<i64: 8, 512>}, {transform_indices = @transform_1, window_bounds = array<i64: 8, 512>}, {transform_indices = @transform_2, window_bounds = array<i64: 8, 512>}]} {
    %c0 = arith.constant 0 : index
    %c0_0 = arith.constant 0 : index
    %0 = vector.load %arg1[%c0, %c0_0] : memref<8x512xf32, #tpu.memory_space<vmem>>, vector<8x512xf32>
    %c0_1 = arith.constant 0 : index
    %c0_2 = arith.constant 0 : index
    %1 = vector.load %arg2[%c0_1, %c0_2] : memref<8x512xf32, #tpu.memory_space<vmem>>, vector<8x512xf32>
    %2 = arith.subf %0, %1 : vector<8x512xf32>
    %3 = arith.mulf %2, %2 : vector<8x512xf32>
    %4 = vector.shape_cast %3 : vector<8x512xf32> to vector<1x8x512xf32>
    %cst = arith.constant dense<0.000000e+00> : vector<8x512xf32>
    %5 = vector.multi_reduction <add>, %4, %cst [0] : vector<1x8x512xf32> to vector<8x512xf32>
    %c0_3 = arith.constant 0 : index
    %c0_4 = arith.constant 0 : index
    %6 = vector.load %arg3[%c0_3, %c0_4] : memref<8x512xf32, #tpu.memory_space<vmem>>, vector<8x512xf32>
    tpu.vector_store %arg3[%c0_3, %c0_4], %5 {strides = array<i32>} : memref<8x512xf32, #tpu.memory_space<vmem>>, vector<8x512xf32>,
    return
  }
  func.func @transform_0(%arg0: i32) -> (i32, i32) {
    %c0_i32 = arith.constant 0 : i32
    %c0_i32_0 = arith.constant 0 : i32
    return %arg0, %c0_i32 : i32, i32
  }
  func.func @transform_1(%arg0: i32) -> (i32, i32) {
    %c0_i32 = arith.constant 0 : i32
    %c0_i32_0 = arith.constant 0 : i32
    return %arg0, %c0_i32 : i32, i32
  }
  func.func @transform_2(%arg0: i32) -> (i32, i32) {
    %c0_i32 = arith.constant 0 : i32
    %c0_i32_0 = arith.constant 0 : i32
    return %arg0, %c0_i32 : i32, i32
  }
}

</mosaic_0001>

<llo_original>
// kernel: tpu_custom_call.1
$region0: #{tpu_custom_call.1}
  #allocation0 [shape = 'u32[]', space=smem, size = 0x4, offset = 0x4, fixed_abs, tag = 'smem constant byte address 0x4 - core index']
  #allocation1 [shape = 'u32[144,128]{1,0:T(1,128)}', space=vmem, size = 0x12000, scoped, tag = 'internal scratch']
  %s0 = inlined_call_operand.hbm [shape: f32[8,512], index: 0, kind: input, shape index: {}]
  %s1 = inlined_call_operand.hbm [shape: f32[8,512], index: 1, kind: input, shape index: {}]
  %s2 = inlined_call_operand.hbm [shape: f32[8,512], index: 2, kind: output, shape index: {}]
  %s3 = sld [smem:[#allocation0]]
  $region26: #{tpu_custom_call.1} parent=0
    _
  %s5 = ssub.s32 1, %s3
  %s6 = scalar_select 0, %s5, %s3
  $region1: #{tpu_custom_call.1} parent=0
    #allocation2 [shape = 'u8[16384]{0}', space=vmem, size = 0x4000, scoped, tag = 'input window, operand 0, single buffered']
    #allocation3 [shape = 's32[1]{0}', space=sflag, size = 0x4, scoped, tag = 'scoped memory for tpu_custom_call.1']
    #allocation4 [shape = 's32[1]{0}', space=sflag, size = 0x4, scoped, tag = 'scoped memory for tpu_custom_call.1']
    #allocation5 [shape = 'u8[16384]{0}', space=vmem, size = 0x4000, scoped, tag = 'input window, operand 1, single buffered']
    #allocation6 [shape = 's32[1]{0}', space=sflag, size = 0x4, scoped, tag = 'scoped memory for tpu_custom_call.1']
    #allocation7 [shape = 'u8[16384]{0}', space=vmem, size = 0x4000, scoped, tag = 'output window, operand 0, single buffered']
    %7 = vsyncpa [#allocation3], 0
    %8 = vsyncpa [#allocation6], 0
    %9 = vsyncpa [#allocation4], 0
    // Predicated region
    $region2: #{tpu_custom_call.1} parent=1 // pred_check
      _
    $region3: #{tpu_custom_call.1} parent=1 // pred_check_branch
      %11 = sbr.rel (0) target = $region5
    $region4: #{tpu_custom_call.1} parent=1 // pred_region
      %s13 = ssub.s32 512, 512
      %14 = vsyncadd [#allocation3], %s13
      %s16 = sshll.u32 [#allocation2], 4
      %s17 = int_to_ptr.vmem [resolvable:$true] %s16
      %19 = dma.hbm_to_vmem [thread:$0]  %s0, 512, %s17, [#allocation3]
    $region5: #{tpu_custom_call.1} parent=1 // pred_fallthru
      _
    // Predicated region
    $region6: #{tpu_custom_call.1} parent=1 // pred_check
      _
    $region7: #{tpu_custom_call.1} parent=1 // pred_check_branch
      %21 = sbr.rel (0) target = $region9
    $region8: #{tpu_custom_call.1} parent=1 // pred_region
      %s23 = ssub.s32 512, 512
      %24 = vsyncadd [#allocation6], %s23
      %s26 = sshll.u32 [#allocation5], 4
      %s27 = int_to_ptr.vmem [resolvable:$true] %s26
      %29 = dma.hbm_to_vmem [thread:$0]  %s1, 512, %s27, [#allocation6]
    $region9: #{tpu_custom_call.1} parent=1 // pred_fallthru
      _
    // Predicated region
    $region10: #{tpu_custom_call.1} parent=1 // pred_check
      _
    $region11: #{tpu_custom_call.1} parent=1 // pred_check_branch
      %31 = sbr.rel (0) target = $region13
    $region12: #{tpu_custom_call.1} parent=1 // pred_region
      %32 = dma.done [#allocation3], 512
    $region13: #{tpu_custom_call.1} parent=1 // pred_fallthru
      _
    // Predicated region
    $region14: #{tpu_custom_call.1} parent=1 // pred_check
      _
    $region15: #{tpu_custom_call.1} parent=1 // pred_check_branch
      %34 = sbr.rel (0) target = $region17
    $region16: #{tpu_custom_call.1} parent=1 // pred_region
      %35 = dma.done [#allocation6], 512
    $region17: #{tpu_custom_call.1} parent=1 // pred_fallthru
      _
    %v36 = vld [vmem:[#allocation2] sm:$0xff]
    %v37 = vld [vmem:[#allocation2 + $0x8] sm:$0xff]
    %v38 = vld [vmem:[#allocation2 + $0x10] sm:$0xff]
    %v39 = vld [vmem:[#allocation2 + $0x18] sm:$0xff]
    %v40 = vld [vmem:[#allocation5] sm:$0xff]
    %v41 = vld [vmem:[#allocation5 + $0x8] sm:$0xff]
    %v42 = vld [vmem:[#allocation5 + $0x10] sm:$0xff]
    %v43 = vld [vmem:[#allocation5 + $0x18] sm:$0xff]
    %v44 = vsub.f32 %v36, %v40
    %v45 = vsub.f32 %v37, %v41
    %v46 = vsub.f32 %v38, %v42
    %v47 = vsub.f32 %v39, %v43
    %v48 = vmul.f32 %v44, %v44
    %v49 = vmul.f32 %v45, %v45
    %v50 = vmul.f32 %v46, %v46
    %v51 = vmul.f32 %v47, %v47
    %v52 = vadd.f32 %v48, 0.0
    %v53 = vadd.f32 %v49, 0.0
    %v54 = vadd.f32 %v50, 0.0
    %v55 = vadd.f32 %v51, 0.0
    %56 = vst [vmem:[#allocation7] sm:$0xff] %v52
    %57 = vst [vmem:[#allocation7 + $0x8] sm:$0xff] %v53
    %58 = vst [vmem:[#allocation7 + $0x10] sm:$0xff] %v54
    %59 = vst [vmem:[#allocation7 + $0x18] sm:$0xff] %v55
    // Predicated region
    $region18: #{tpu_custom_call.1} parent=1 // pred_check
      _
    $region19: #{tpu_custom_call.1} parent=1 // pred_check_branch
      %61 = sbr.rel (0) target = $region21
    $region20: #{tpu_custom_call.1} parent=1 // pred_region
      %s63 = ssub.s32 512, 512
      %64 = vsyncadd [#allocation4], %s63
      %s66 = sshll.u32 [#allocation7], 4
      %s67 = int_to_ptr.vmem [resolvable:$true] %s66
      %69 = dma.vmem_to_hbm [thread:$0]  %s67, 512, %s2, [#allocation4]
    $region21: #{tpu_custom_call.1} parent=1 // pred_fallthru
      _
    // Predicated region
    $region22: #{tpu_custom_call.1} parent=1 // pred_check
      _
    $region23: #{tpu_custom_call.1} parent=1 // pred_check_branch
      %71 = sbr.rel (0) target = $region25
    $region24: #{tpu_custom_call.1} parent=1 // pred_region
      %72 = dma.done [#allocation4], 512
    $region25: #{tpu_custom_call.1} parent=1 // pred_fallthru
      _
    %73 = vsyncpa [#allocation3], 1
    %74 = vsyncpa [#allocation6], 1
    %75 = vsyncpa [#allocation4], 1

</llo_original>
